<compile_context>
chip_gen: v5e
topology: v5e:2x2
jax: 0.10.0
libtpu: 0.0.40
codegen_flags: <defaults>
</compile_context>

<pallas_src>
import numpy as np
import jax
import jax.numpy as jnp
from jax import lax
from jax.experimental import pallas as pl
from jax.experimental.pallas import tpu as pltpu


def _adaptive_bins(size, out_size):
    """PyTorch AdaptiveAvgPool bin boundaries (floor start / ceil end)."""
    return [((p * size) // out_size, -(-((p + 1) * size) // out_size))
            for p in range(out_size)]


def _round_up(x, m):
    return -(-x // m) * m


def make_conv_embedding(params, kernel_size, in_hw, pool_hw=(3, 2),
                        matmul_dtype=jnp.bfloat16, batch_block=64):
    """Build a jitted forward(x_nchw) for the fused ConvEmbedding kernel."""
    k = int(kernel_size)
    H, W = map(int, in_hw)
    ph, pw = map(int, pool_hw)

    w1 = jnp.asarray(params["w1"], jnp.float32)   # (C1, Cin, k, k)
    b1 = jnp.asarray(params["b1"], jnp.float32)
    w2 = jnp.asarray(params["w2"], jnp.float32)   # (C2, C1, k, k)
    b2 = jnp.asarray(params["b2"], jnp.float32)
    C1, Cin = int(w1.shape[0]), int(w1.shape[1])
    C2 = int(w2.shape[0])
    H1, W1 = H - k + 1, W - k + 1
    H2, W2 = H1 - k + 1, W1 - k + 1
    assert H2 >= ph and W2 >= pw

    KW = Cin * W                  # x lane dim   : x[b, i, c*W + j]
    N1 = W1 * C1                  # y1 lane dim  : y1[b, i, j*C1 + o]
    N2 = W2 * C2                  # y2 lane dim  : y2[b, i, j*C2 + o]
    OUT = C2 * ph * pw            # flattened pooled output (PyTorch order)
    N1P = _round_up(N1, 128)      # 112 -> 128
    N2P = _round_up(N2, 128)      # 192 -> 256
    OUTP = _round_up(OUT, 128)    # 96  -> 128

    # MXU precision: pin HIGHEST for the f32 validation build.
    prec = lax.Precision.HIGHEST if matmul_dtype == jnp.float32 else None

    # --------------- one-time weight packing (outside the forward path) -----
    def shift_scatter(w_in, w_out):
        s = np.zeros((k, w_in, w_out), np.float32)
        for dj in range(k):
            for j in range(w_out):
                s[dj, j + dj, j] = 1.0
        return jnp.asarray(s)

    S1 = shift_scatter(W, W1)      # (k, W,  W1)
    S2 = shift_scatter(W1, W2)     # (k, W1, W2)

    # w1_pack[di, c*W + j_in, j_out*C1 + o] = w1[o, c, di, j_in - j_out]
    w1_pack = jnp.einsum("epq,ocde->dcpqo", S1, w1).reshape(k, KW, N1)
    # w2_pack[di, j_in*C1 + c, j_out*C2 + o] = w2[o, c, di, j_in - j_out]
    w2_pack = jnp.einsum("epq,ocde->dpcqo", S2, w2).reshape(k, N1, N2)
    w1_pack = jnp.pad(w1_pack, ((0, 0), (0, 0), (0, N1P - N1))).astype(matmul_dtype)
    w2_pack = jnp.pad(w2_pack, ((0, 0), (0, N1P - N1),
                                (0, N2P - N2))).astype(matmul_dtype)
    b1_pack = jnp.pad(jnp.tile(b1, W1), (0, N1P - N1)).reshape(1, N1P)
    b2_pack = jnp.pad(jnp.tile(b2, W2), (0, N2P - N2)).reshape(1, N2P)

    # Adaptive-avg-pool (exact PyTorch bins).  mp[p] applies the col-bin
    # averaging + channel scatter directly into PyTorch flatten order, with the
    # row-bin 1/len folded in as well.  Kept in f32 for exact averaging weights.
    row_bins = _adaptive_bins(H2, ph)
    col_bins = _adaptive_bins(W2, pw)
    mp_np = np.zeros((ph, N2P, OUTP), np.float32)
    for p, (rs, re) in enumerate(row_bins):
        rw = 1.0 / (re - rs)
        for q, (cs, ce) in enumerate(col_bins):
            cw = 1.0 / (ce - cs)
            for j in range(cs, ce):
                for o in range(C2):
                    mp_np[p, j * C2 + o, o * ph * pw + p * pw + q] = rw * cw
    mp = jnp.asarray(mp_np)

    def forward(x_nchw):
        n = int(x_nchw.shape[0])
        bt = n if n <= batch_block else batch_block
        if n > bt:                       # multi-block: keep output blocks 8-aligned
            bt = _round_up(bt, 8)
        n_pad = _round_up(n, bt)
        n_blk = n_pad // bt
        R = bt * H                       # rows of one flat x block (batch-major)
        L1 = R - (k - 1)                 # rows carrying conv1 partial results
        L2 = R - 2 * (k - 1)             # rows carrying conv2 partial results
        # For image b (flat row base b*H): conv1 rows [0,H1) and conv2 rows
        # [0,H2) are valid; trailing per-image rows are finite garbage that the
        # pooling selection matrices never pick up.

        # 0/1 row-bin selection: pool_sel[p, b, b*H + i] = 1 for i in row-bin p.
        pool_np = np.zeros((ph, bt, L2), np.float32)
        for p, (rs, re) in enumerate(row_bins):
            for b in range(bt):
                pool_np[p, b, b * H + rs: b * H + re] = 1.0
        pool_sel = jnp.asarray(pool_np)

        def kernel(x_ref, w1_ref, b1_ref, w2_ref, b2_ref, sel_ref, mp_ref,
                   o_ref, y1_scr):
            # ---- conv1 + bias + ReLU: k flat row-shifted MXU matmuls, f32 acc
            acc1 = jnp.dot(x_ref[0:L1, :], w1_ref[0], precision=prec,
                           preferred_element_type=jnp.float32)
            for di in range(1, k):
                acc1 += jnp.dot(x_ref[di:di + L1, :], w1_ref[di], precision=prec,
                                preferred_element_type=jnp.float32)
            y1_scr[...] = jnp.maximum(acc1 + b1_ref[...], 0.0).astype(y1_scr.dtype)

            # ---- conv2 + bias + ReLU
            acc2 = jnp.dot(y1_scr[0:L2, :], w2_ref[0], precision=prec,
                           preferred_element_type=jnp.float32)
            for di in range(1, k):
                acc2 += jnp.dot(y1_scr[di:di + L2, :], w2_ref[di], precision=prec,
                                preferred_element_type=jnp.float32)
            y2 = jnp.maximum(acc2 + b2_ref[...], 0.0)          # (L2, N2P) f32

            # ---- AdaptiveAvgPool2d((ph, pw)) + flatten, per row-bin:
            # 0/1 selection matmul sums the bin's rows for every image, then the
            # col-bin averaging matmul scatters into PyTorch flatten order.
            out = None
            for p in range(ph):
                zp = jnp.dot(sel_ref[p], y2, precision=prec,
                             preferred_element_type=jnp.float32)
                qp = jnp.dot(zp, mp_ref[p], precision=prec,
                             preferred_element_type=jnp.float32)
                out = qp if out is None else out + qp
            o_ref[...] = out.astype(o_ref.dtype)

        # Cheap relayout: NCHW -> (N, H, Cin, W) -> (N*H, Cin*W), emitted in the
        # MXU operand dtype so the kernel never casts the activation.
        x2 = jnp.transpose(x_nchw.astype(matmul_dtype), (0, 2, 1, 3))
        x2 = x2.reshape(n, H, KW)
        if n_pad != n:
            x2 = jnp.concatenate(
                [x2, jnp.zeros((n_pad - n, H, KW), x2.dtype)], axis=0)
        x2 = x2.reshape(n_pad * H, KW)

        flops = 2 * n_blk * (k * L1 * KW * N1P + k * L2 * N1P * N2P
                             + ph * (bt * L2 * N2P + bt * N2P * OUTP))
        bytes_accessed = int(
            x2.size * x2.dtype.itemsize
            + w1_pack.size * w1_pack.dtype.itemsize
            + w2_pack.size * w2_pack.dtype.itemsize
            + (b1_pack.size + b2_pack.size + mp.size + pool_sel.size) * 4
            + n_pad * OUTP * 4)

        out = pl.pallas_call(
            kernel,
            out_shape=jax.ShapeDtypeStruct((n_pad, OUTP), jnp.float32),
            grid=(n_blk,),
            in_specs=[
                pl.BlockSpec((R, KW), lambda b: (b, 0)),
                pl.BlockSpec((k, KW, N1P), lambda b: (0, 0, 0)),
                pl.BlockSpec((1, N1P), lambda b: (0, 0)),
                pl.BlockSpec((k, N1P, N2P), lambda b: (0, 0, 0)),
                pl.BlockSpec((1, N2P), lambda b: (0, 0)),
                pl.BlockSpec((ph, bt, L2), lambda b: (0, 0, 0)),
                pl.BlockSpec((ph, N2P, OUTP), lambda b: (0, 0, 0)),
            ],
            out_specs=pl.BlockSpec((bt, OUTP), lambda b: (b, 0)),
            scratch_shapes=[pltpu.VMEM((L1, N1P), matmul_dtype)],
            compiler_params=pltpu.CompilerParams(
                # On v7x, pltpu.CORE_PARALLEL here engages both TensorCores;
                # "parallel" is the safe default on single-TC v5e/v6e.
                dimension_semantics=("parallel",)),
            cost_estimate=pl.CostEstimate(
                flops=int(flops), transcendentals=0,
                bytes_accessed=bytes_accessed),
        )(x2, w1_pack, b1_pack, w2_pack, b2_pack, pool_sel, mp)

        return out[:n, :OUT]

    return jax.jit(forward)


# ----------------------------- pure-JAX reference ---------------------------- #

def reference_forward(x_nchw, params, kernel_size):
    w1 = jnp.asarray(params["w1"], jnp.float32)
    b1 = jnp.asarray(params["b1"], jnp.float32)
    w2 = jnp.asarray(params["w2"], jnp.float32)
    b2 = jnp.asarray(params["b2"], jnp.float32)
    dn = ("NCHW", "OIHW", "NCHW")
    y = lax.conv_general_dilated(x_nchw, w1, (1, 1), "VALID",
                                 dimension_numbers=dn,
                                 precision=lax.Precision.HIGHEST)
    y = jnp.maximum(y + b1[None, :, None, None], 0.0)
    y = lax.conv_general_dilated(y, w2, (1, 1), "VALID",
                                 dimension_numbers=dn,
                                 precision=lax.Precision.HIGHEST)
    y = jnp.maximum(y + b2[None, :, None, None], 0.0)
    B, C, Hh, Ww = y.shape
    rows = []
    for p_h in range(3):
        hs, he = (p_h * Hh) // 3, -(-((p_h + 1) * Hh) // 3)
        cols = []
        for p_w in range(2):
            ws, we = (p_w * Ww) // 2, -(-((p_w + 1) * Ww) // 2)
            cols.append(jnp.mean(y[:, :, hs:he, ws:we], axis=(2, 3)))
        rows.append(jnp.stack(cols, axis=-1))
    pooled = jnp.stack(rows, axis=-2)            # (B, C, 3, 2)
    return pooled.reshape(B, C * 6)


# ------------------------------------- main ---------------------------------- #

if __name__ == "__main__":
    key = jax.random.PRNGKey(0)
    B, Cin, H, W = 2, 4, 16, 16
    kernel_size = 3
    out_channels = 16

    k_x, k_w1, k_b1, k_w2, k_b2, k_xb = jax.random.split(key, 6)
    x = jax.random.normal(k_x, (B, Cin, H, W), dtype=jnp.float32)

    fan1 = Cin * kernel_size * kernel_size
    fan2 = 8 * kernel_size * kernel_size
    params = {
        "w1": jax.random.normal(k_w1, (8, Cin, kernel_size, kernel_size),
                                dtype=jnp.float32) / np.sqrt(fan1),
        "b1": jax.random.normal(k_b1, (8,), dtype=jnp.float32) * 0.1,
        "w2": jax.random.normal(k_w2, (out_channels, 8, kernel_size, kernel_size),
                                dtype=jnp.float32) / np.sqrt(fan2),
        "b2": jax.random.normal(k_b2, (out_channels,), dtype=jnp.float32) * 0.1,
    }

    ref = jax.block_until_ready(reference_forward(x, params, kernel_size))

    # bf16 MXU path (production): bf16 operands, f32 accumulation.
    fwd_bf16 = make_conv_embedding(params, kernel_size, (H, W))
    out = jax.block_until_ready(fwd_bf16(x))
    assert out.shape == (B, out_channels * 6), out.shape
    np.testing.assert_allclose(np.asarray(out), np.asarray(ref),
                               rtol=2e-2, atol=2e-2)

    # f32 MXU path (validation-only): tight-tolerance semantics check.
    fwd_f32 = make_conv_embedding(params, kernel_size, (H, W),
                                  matmul_dtype=jnp.float32)
    out32 = jax.block_until_ready(fwd_f32(x))
    np.testing.assert_allclose(np.asarray(out32), np.asarray(ref),
                               rtol=2e-3, atol=2e-3)

    # Multi-block grid + batch padding path (bt=8, grid=3, n_pad=24 > n=20).
    xb = jax.random.normal(k_xb, (20, Cin, H, W), dtype=jnp.float32)
    refb = jax.block_until_ready(reference_forward(xb, params, kernel_size))
    fwd_blk = make_conv_embedding(params, kernel_size, (H, W), batch_block=8)
    outb = jax.block_until_ready(fwd_blk(xb))
    np.testing.assert_allclose(np.asarray(outb), np.asarray(refb),
                               rtol=2e-2, atol=2e-2)

    print("KERNEL_OK")
</pallas_src>

<mosaic_0001>
module attributes {stable_mosaic.version = 11 : i64} {
  func.func @kernel(%arg0: i32, %arg1: memref<32x64xbf16, #tpu.memory_space<vmem>>, %arg2: memref<3x64x128xbf16, #tpu.memory_space<vmem>>, %arg3: memref<1x128xf32, #tpu.memory_space<vmem>>, %arg4: memref<3x128x256xbf16, #tpu.memory_space<vmem>>, %arg5: memref<1x256xf32, #tpu.memory_space<vmem>>, %arg6: memref<3x2x28xf32, #tpu.memory_space<vmem>>, %arg7: memref<3x256x128xf32, #tpu.memory_space<vmem>>, %arg8: memref<2x128xf32, #tpu.memory_space<vmem>>, %arg9: memref<30x128xbf16, #tpu.memory_space<vmem>>) attributes {dimension_semantics = [#tpu.dimension_semantics<parallel>], iteration_bounds = array<i64: 1>, scalar_prefetch = 0 : i64, scratch_operands = 1 : i64, tpu.core_type = #tpu.core_type<tc>, window_params = [{transform_indices = @transform_0, window_bounds = array<i64: 32, 64>}, {pipeline_mode = #tpu.pipeline_mode<synchronous>, transform_indices = @transform_1, window_bounds = array<i64: 3, 64, 128>}, {pipeline_mode = #tpu.pipeline_mode<synchronous>, transform_indices = @transform_2, window_bounds = array<i64: 1, 128>}, {pipeline_mode = #tpu.pipeline_mode<synchronous>, transform_indices = @transform_3, window_bounds = array<i64: 3, 128, 256>}, {pipeline_mode = #tpu.pipeline_mode<synchronous>, transform_indices = @transform_4, window_bounds = array<i64: 1, 256>}, {pipeline_mode = #tpu.pipeline_mode<synchronous>, transform_indices = @transform_5, window_bounds = array<i64: 3, 2, 28>}, {pipeline_mode = #tpu.pipeline_mode<synchronous>, transform_indices = @transform_6, window_bounds = array<i64: 3, 256, 128>}, {transform_indices = @transform_7, window_bounds = array<i64: 2, 128>}]} {
    %c0 = arith.constant 0 : index
    %c0_0 = arith.constant 0 : index
    %0 = vector.load %arg1[%c0, %c0_0] : memref<32x64xbf16, #tpu.memory_space<vmem>>, vector<30x64xbf16>
    %c0_1 = arith.constant 0 : index
    %c0_2 = arith.constant 0 : index
    %c0_3 = arith.constant 0 : index
    %1 = vector.load %arg2[%c0_1, %c0_2, %c0_3] : memref<3x64x128xbf16, #tpu.memory_space<vmem>>, vector<1x64x128xbf16>
    %2 = vector.shape_cast %1 : vector<1x64x128xbf16> to vector<64x128xbf16>
    %cst = arith.constant dense<0.000000e+00> : vector<30x128xf32>
    %3 = tpu.matmul %0, %2, %cst {dimension_numbers = #tpu.dot_dimension_numbers<[1], [0], [0], [1], [0, 0, 1, 1], [], []>} : vector<30x64xbf16>, vector<64x128xbf16>, vector<30x128xf32> -> vector<30x128xf32>
    %c1 = arith.constant 1 : index
    %c0_4 = arith.constant 0 : index
    %4 = vector.load %arg1[%c1, %c0_4] : memref<32x64xbf16, #tpu.memory_space<vmem>>, vector<30x64xbf16>
    %c1_5 = arith.constant 1 : index
    %c0_6 = arith.constant 0 : index
    %c0_7 = arith.constant 0 : index
    %5 = vector.load %arg2[%c1_5, %c0_6, %c0_7] : memref<3x64x128xbf16, #tpu.memory_space<vmem>>, vector<1x64x128xbf16>
    %6 = vector.shape_cast %5 : vector<1x64x128xbf16> to vector<64x128xbf16>
    %cst_8 = arith.constant dense<0.000000e+00> : vector<30x128xf32>
    %7 = tpu.matmul %4, %6, %cst_8 {dimension_numbers = #tpu.dot_dimension_numbers<[1], [0], [0], [1], [0, 0, 1, 1], [], []>} : vector<30x64xbf16>, vector<64x128xbf16>, vector<30x128xf32> -> vector<30x128xf32>
    %8 = arith.addf %3, %7 : vector<30x128xf32>
    %c2 = arith.constant 2 : index
    %c0_9 = arith.constant 0 : index
    %9 = vector.load %arg1[%c2, %c0_9] : memref<32x64xbf16, #tpu.memory_space<vmem>>, vector<30x64xbf16>
    %c2_10 = arith.constant 2 : index
    %c0_11 = arith.constant 0 : index
    %c0_12 = arith.constant 0 : index
    %10 = vector.load %arg2[%c2_10, %c0_11, %c0_12] : memref<3x64x128xbf16, #tpu.memory_space<vmem>>, vector<1x64x128xbf16>
    %11 = vector.shape_cast %10 : vector<1x64x128xbf16> to vector<64x128xbf16>
    %cst_13 = arith.constant dense<0.000000e+00> : vector<30x128xf32>
    %12 = tpu.matmul %9, %11, %cst_13 {dimension_numbers = #tpu.dot_dimension_numbers<[1], [0], [0], [1], [0, 0, 1, 1], [], []>} : vector<30x64xbf16>, vector<64x128xbf16>, vector<30x128xf32> -> vector<30x128xf32>
    %13 = arith.addf %8, %12 : vector<30x128xf32>
    %c0_14 = arith.constant 0 : index
    %c0_15 = arith.constant 0 : index
    %14 = vector.load %arg3[%c0_14, %c0_15] : memref<1x128xf32, #tpu.memory_space<vmem>>, vector<1x128xf32>
    %15 = vector.broadcast %14 : vector<1x128xf32> to vector<30x128xf32>
    %16 = arith.addf %13, %15 : vector<30x128xf32>
    %cst_16 = arith.constant 0.000000e+00 : f32
    %17 = vector.broadcast %cst_16 : f32 to vector<30x128xf32>
    %18 = arith.maximumf %16, %17 : vector<30x128xf32>
    %19 = arith.truncf %18 : vector<30x128xf32> to vector<30x128xbf16>
    %c0_17 = arith.constant 0 : index
    %c0_18 = arith.constant 0 : index
    %20 = vector.load %arg9[%c0_17, %c0_18] : memref<30x128xbf16, #tpu.memory_space<vmem>>, vector<30x128xbf16>
    tpu.vector_store %arg9[%c0_17, %c0_18], %19 {strides = array<i32>} : memref<30x128xbf16, #tpu.memory_space<vmem>>, vector<30x128xbf16>,
    %c0_19 = arith.constant 0 : index
    %c0_20 = arith.constant 0 : index
    %21 = vector.load %arg9[%c0_19, %c0_20] : memref<30x128xbf16, #tpu.memory_space<vmem>>, vector<28x128xbf16>
    %c0_21 = arith.constant 0 : index
    %c0_22 = arith.constant 0 : index
    %c0_23 = arith.constant 0 : index
    %22 = vector.load %arg4[%c0_21, %c0_22, %c0_23] : memref<3x128x256xbf16, #tpu.memory_space<vmem>>, vector<1x128x256xbf16>
    %23 = vector.shape_cast %22 : vector<1x128x256xbf16> to vector<128x256xbf16>
    %cst_24 = arith.constant dense<0.000000e+00> : vector<28x256xf32>
    %24 = tpu.matmul %21, %23, %cst_24 {dimension_numbers = #tpu.dot_dimension_numbers<[1], [0], [0], [1], [0, 0, 1, 1], [], []>} : vector<28x128xbf16>, vector<128x256xbf16>, vector<28x256xf32> -> vector<28x256xf32>
    %c1_25 = arith.constant 1 : index
    %c0_26 = arith.constant 0 : index
    %25 = vector.load %arg9[%c1_25, %c0_26] : memref<30x128xbf16, #tpu.memory_space<vmem>>, vector<28x128xbf16>
    %c1_27 = arith.constant 1 : index
    %c0_28 = arith.constant 0 : index
    %c0_29 = arith.constant 0 : index
    %26 = vector.load %arg4[%c1_27, %c0_28, %c0_29] : memref<3x128x256xbf16, #tpu.memory_space<vmem>>, vector<1x128x256xbf16>
    %27 = vector.shape_cast %26 : vector<1x128x256xbf16> to vector<128x256xbf16>
    %cst_30 = arith.constant dense<0.000000e+00> : vector<28x256xf32>
    %28 = tpu.matmul %25, %27, %cst_30 {dimension_numbers = #tpu.dot_dimension_numbers<[1], [0], [0], [1], [0, 0, 1, 1], [], []>} : vector<28x128xbf16>, vector<128x256xbf16>, vector<28x256xf32> -> vector<28x256xf32>
    %29 = arith.addf %24, %28 : vector<28x256xf32>
    %c2_31 = arith.constant 2 : index
    %c0_32 = arith.constant 0 : index
    %30 = vector.load %arg9[%c2_31, %c0_32] : memref<30x128xbf16, #tpu.memory_space<vmem>>, vector<28x128xbf16>
    %c2_33 = arith.constant 2 : index
    %c0_34 = arith.constant 0 : index
    %c0_35 = arith.constant 0 : index
    %31 = vector.load %arg4[%c2_33, %c0_34, %c0_35] : memref<3x128x256xbf16, #tpu.memory_space<vmem>>, vector<1x128x256xbf16>
    %32 = vector.shape_cast %31 : vector<1x128x256xbf16> to vector<128x256xbf16>
    %cst_36 = arith.constant dense<0.000000e+00> : vector<28x256xf32>
    %33 = tpu.matmul %30, %32, %cst_36 {dimension_numbers = #tpu.dot_dimension_numbers<[1], [0], [0], [1], [0, 0, 1, 1], [], []>} : vector<28x128xbf16>, vector<128x256xbf16>, vector<28x256xf32> -> vector<28x256xf32>
    %34 = arith.addf %29, %33 : vector<28x256xf32>
    %c0_37 = arith.constant 0 : index
    %c0_38 = arith.constant 0 : index
    %35 = vector.load %arg5[%c0_37, %c0_38] : memref<1x256xf32, #tpu.memory_space<vmem>>, vector<1x256xf32>
    %36 = vector.broadcast %35 : vector<1x256xf32> to vector<28x256xf32>
    %37 = arith.addf %34, %36 : vector<28x256xf32>
    %cst_39 = arith.constant 0.000000e+00 : f32
    %38 = vector.broadcast %cst_39 : f32 to vector<28x256xf32>
    %39 = arith.maximumf %37, %38 : vector<28x256xf32>
    %c0_40 = arith.constant 0 : index
    %c0_41 = arith.constant 0 : index
    %c0_42 = arith.constant 0 : index
    %40 = vector.load %arg6[%c0_40, %c0_41, %c0_42] : memref<3x2x28xf32, #tpu.memory_space<vmem>>, vector<1x2x28xf32>
    %41 = vector.shape_cast %40 : vector<1x2x28xf32> to vector<2x28xf32>
    %cst_43 = arith.constant dense<0.000000e+00> : vector<2x256xf32>
    %42 = tpu.matmul %41, %39, %cst_43 {dimension_numbers = #tpu.dot_dimension_numbers<[1], [0], [0], [1], [0, 0, 1, 1], [], []>} : vector<2x28xf32>, vector<28x256xf32>, vector<2x256xf32> -> vector<2x256xf32>
    %c0_44 = arith.constant 0 : index
    %c0_45 = arith.constant 0 : index
    %c0_46 = arith.constant 0 : index
    %43 = vector.load %arg7[%c0_44, %c0_45, %c0_46] : memref<3x256x128xf32, #tpu.memory_space<vmem>>, vector<1x256x128xf32>
    %44 = vector.shape_cast %43 : vector<1x256x128xf32> to vector<256x128xf32>
    %cst_47 = arith.constant dense<0.000000e+00> : vector<2x128xf32>
    %45 = tpu.matmul %42, %44, %cst_47 {dimension_numbers = #tpu.dot_dimension_numbers<[1], [0], [0], [1], [0, 0, 1, 1], [], []>} : vector<2x256xf32>, vector<256x128xf32>, vector<2x128xf32> -> vector<2x128xf32>
    %c1_48 = arith.constant 1 : index
    %c0_49 = arith.constant 0 : index
    %c0_50 = arith.constant 0 : index
    %46 = vector.load %arg6[%c1_48, %c0_49, %c0_50] : memref<3x2x28xf32, #tpu.memory_space<vmem>>, vector<1x2x28xf32>
    %47 = vector.shape_cast %46 : vector<1x2x28xf32> to vector<2x28xf32>
    %cst_51 = arith.constant dense<0.000000e+00> : vector<2x256xf32>
    %48 = tpu.matmul %47, %39, %cst_51 {dimension_numbers = #tpu.dot_dimension_numbers<[1], [0], [0], [1], [0, 0, 1, 1], [], []>} : vector<2x28xf32>, vector<28x256xf32>, vector<2x256xf32> -> vector<2x256xf32>
    %c1_52 = arith.constant 1 : index
    %c0_53 = arith.constant 0 : index
    %c0_54 = arith.constant 0 : index
    %49 = vector.load %arg7[%c1_52, %c0_53, %c0_54] : memref<3x256x128xf32, #tpu.memory_space<vmem>>, vector<1x256x128xf32>
    %50 = vector.shape_cast %49 : vector<1x256x128xf32> to vector<256x128xf32>
    %cst_55 = arith.constant dense<0.000000e+00> : vector<2x128xf32>
    %51 = tpu.matmul %48, %50, %cst_55 {dimension_numbers = #tpu.dot_dimension_numbers<[1], [0], [0], [1], [0, 0, 1, 1], [], []>} : vector<2x256xf32>, vector<256x128xf32>, vector<2x128xf32> -> vector<2x128xf32>
    %52 = arith.addf %45, %51 : vector<2x128xf32>
    %c2_56 = arith.constant 2 : index
    %c0_57 = arith.constant 0 : index
    %c0_58 = arith.constant 0 : index
    %53 = vector.load %arg6[%c2_56, %c0_57, %c0_58] : memref<3x2x28xf32, #tpu.memory_space<vmem>>, vector<1x2x28xf32>
    %54 = vector.shape_cast %53 : vector<1x2x28xf32> to vector<2x28xf32>
    %cst_59 = arith.constant dense<0.000000e+00> : vector<2x256xf32>
    %55 = tpu.matmul %54, %39, %cst_59 {dimension_numbers = #tpu.dot_dimension_numbers<[1], [0], [0], [1], [0, 0, 1, 1], [], []>} : vector<2x28xf32>, vector<28x256xf32>, vector<2x256xf32> -> vector<2x256xf32>
    %c2_60 = arith.constant 2 : index
    %c0_61 = arith.constant 0 : index
    %c0_62 = arith.constant 0 : index
    %56 = vector.load %arg7[%c2_60, %c0_61, %c0_62] : memref<3x256x128xf32, #tpu.memory_space<vmem>>, vector<1x256x128xf32>
    %57 = vector.shape_cast %56 : vector<1x256x128xf32> to vector<256x128xf32>
    %cst_63 = arith.constant dense<0.000000e+00> : vector<2x128xf32>
    %58 = tpu.matmul %55, %57, %cst_63 {dimension_numbers = #tpu.dot_dimension_numbers<[1], [0], [0], [1], [0, 0, 1, 1], [], []>} : vector<2x256xf32>, vector<256x128xf32>, vector<2x128xf32> -> vector<2x128xf32>
    %59 = arith.addf %52, %58 : vector<2x128xf32>
    %c0_64 = arith.constant 0 : index
    %c0_65 = arith.constant 0 : index
    %60 = vector.load %arg8[%c0_64, %c0_65] : memref<2x128xf32, #tpu.memory_space<vmem>>, vector<2x128xf32>
    tpu.vector_store %arg8[%c0_64, %c0_65], %59 {strides = array<i32>} : memref<2x128xf32, #tpu.memory_space<vmem>>, vector<2x128xf32>,
    return
  }
  func.func @transform_0(%arg0: i32) -> (i32, i32) {
    %c0_i32 = arith.constant 0 : i32
    %c0_i32_0 = arith.constant 0 : i32
    return %arg0, %c0_i32 : i32, i32
  }
  func.func @transform_1(%arg0: i32) -> (i32, i32, i32) {
    %c0_i32 = arith.constant 0 : i32
    %c0_i32_0 = arith.constant 0 : i32
    %c0_i32_1 = arith.constant 0 : i32
    %c0_i32_2 = arith.constant 0 : i32
    return %c0_i32, %c0_i32_0, %c0_i32_1 : i32, i32, i32
  }
  func.func @transform_2(%arg0: i32) -> (i32, i32) {
    %c0_i32 = arith.constant 0 : i32
    %c0_i32_0 = arith.constant 0 : i32
    %c0_i32_1 = arith.constant 0 : i32
    return %c0_i32, %c0_i32_0 : i32, i32
  }
  func.func @transform_3(%arg0: i32) -> (i32, i32, i32) {
    %c0_i32 = arith.constant 0 : i32
    %c0_i32_0 = arith.constant 0 : i32
    %c0_i32_1 = arith.constant 0 : i32
    %c0_i32_2 = arith.constant 0 : i32
    return %c0_i32, %c0_i32_0, %c0_i32_1 : i32, i32, i32
  }
  func.func @transform_4(%arg0: i32) -> (i32, i32) {
    %c0_i32 = arith.constant 0 : i32
    %c0_i32_0 = arith.constant 0 : i32
    %c0_i32_1 = arith.constant 0 : i32
    return %c0_i32, %c0_i32_0 : i32, i32
  }
  func.func @transform_5(%arg0: i32) -> (i32, i32, i32) {
    %c0_i32 = arith.constant 0 : i32
    %c0_i32_0 = arith.constant 0 : i32
    %c0_i32_1 = arith.constant 0 : i32
    %c0_i32_2 = arith.constant 0 : i32
    return %c0_i32, %c0_i32_0, %c0_i32_1 : i32, i32, i32
  }
  func.func @transform_6(%arg0: i32) -> (i32, i32, i32) {
    %c0_i32 = arith.constant 0 : i32
    %c0_i32_0 = arith.constant 0 : i32
    %c0_i32_1 = arith.constant 0 : i32
    %c0_i32_2 = arith.constant 0 : i32
    return %c0_i32, %c0_i32_0, %c0_i32_1 : i32, i32, i32
  }
  func.func @transform_7(%arg0: i32) -> (i32, i32) {
    %c0_i32 = arith.constant 0 : i32
    %c0_i32_0 = arith.constant 0 : i32
    return %arg0, %c0_i32 : i32, i32
  }
}

</mosaic_0001>

<llo_original>
// kernel: forward.1
$region0: #{forward.1}
  #allocation0 [shape = 'u32[]', space=smem, size = 0x4, offset = 0x4, fixed_abs, tag = 'smem constant byte address 0x4 - core index']
  #allocation1 [shape = 'u32[72,128]{1,0:T(1,128)}', space=vmem, size = 0x9000, scoped, tag = 'internal scratch']
  #allocation2 [shape = 'bf16[30,128]{1,0:T(8,128)(2,1)}', space=vmem, size = 0x2000, scoped, tag = 'scratch operand']
  %s0 = inlined_call_operand.vmem [shape: bf16[32,64], index: 0, kind: input, shape index: {}]
  %s1 = inlined_call_operand.hbm [shape: bf16[3,64,128], index: 1, kind: input, shape index: {}]
  %s2 = inlined_call_operand.vmem [shape: f32[1,128], index: 2, kind: input, shape index: {}]
  %s3 = inlined_call_operand.vmem [shape: bf16[3,128,256], index: 3, kind: input, shape index: {}]
  %s4 = inlined_call_operand.vmem [shape: f32[1,256], index: 4, kind: input, shape index: {}]
  %s5 = inlined_call_operand.vmem [shape: f32[3,2,28], index: 5, kind: input, shape index: {}]
  %s6 = inlined_call_operand.hbm [shape: f32[3,256,128], index: 6, kind: input, shape index: {}]
  %s7 = inlined_call_operand.hbm [shape: f32[2,128], index: 7, kind: output, shape index: {}]
  %s8 = sld [smem:[#allocation0]]
  $region46: #{forward.1} parent=0
    _
  %s10 = ssub.s32 1, %s8
  %s11 = scalar_select 0, %s10, %s8
  $region1: #{forward.1} parent=0
    #allocation3 [shape = 'u8[49152]{0}', space=vmem, size = 0xc000, scoped, tag = 'input window, operand 1, single buffered']
    #allocation4 [shape = 's32[1]{0}', space=sflag, size = 0x4, scoped, tag = 'scoped memory for forward.1']
    #allocation5 [shape = 's32[1]{0}', space=sflag, size = 0x4, scoped, tag = 'scoped memory for forward.1']
    #allocation6 [shape = 'u8[393216]{0}', space=vmem, size = 0x60000, scoped, tag = 'input window, operand 6, single buffered']
    #allocation7 [shape = 's32[1]{0}', space=sflag, size = 0x4, scoped, tag = 'scoped memory for forward.1']
    #allocation8 [shape = 'u8[1024]{0}', space=vmem, size = 0x400, scoped, tag = 'output window, operand 0, single buffered']
    %12 = vsyncpa [#allocation4], 0
    %13 = vsyncpa [#allocation7], 0
    %14 = vsyncpa [#allocation5], 0
    // Predicated region
    $region2: #{forward.1} parent=1 // pred_check
      _
    $region3: #{forward.1} parent=1 // pred_check_branch
      %16 = sbr.rel (0) target = $region5
    $region4: #{forward.1} parent=1 // pred_region
      _
    $region5: #{forward.1} parent=1 // pred_fallthru
      _
    // Predicated region
    $region6: #{forward.1} parent=1 // pred_check
      _
    $region7: #{forward.1} parent=1 // pred_check_branch
      %18 = sbr.rel (0) target = $region9
    $region8: #{forward.1} parent=1 // pred_region
      %20 = vsyncadd [#allocation4], 0
      %s21 = sshll.u32 %s1, 4
      %s22 = int_to_ptr.hbm [resolvable:$true] %s21
      %s23 = sshll.u32 [#allocation3], 4
      %s24 = int_to_ptr.vmem [resolvable:$true] %s23
      %29 = dma.hbm_to_vmem [thread:$0]  %s22, 1536, %s24, [#allocation4], 64, 64, 4
    $region9: #{forward.1} parent=1 // pred_fallthru
      _
    // Predicated region
    $region10: #{forward.1} parent=1 // pred_check
      _
    $region11: #{forward.1} parent=1 // pred_check_branch
      %31 = sbr.rel (0) target = $region13
    $region12: #{forward.1} parent=1 // pred_region
      _
    $region13: #{forward.1} parent=1 // pred_fallthru
      _
    // Predicated region
    $region14: #{forward.1} parent=1 // pred_check
      _
    $region15: #{forward.1} parent=1 // pred_check_branch
      %33 = sbr.rel (0) target = $region17
    $region16: #{forward.1} parent=1 // pred_region
      _
    $region17: #{forward.1} parent=1 // pred_fallthru
      _
    // Predicated region
    $region18: #{forward.1} parent=1 // pred_check
      _
    $region19: #{forward.1} parent=1 // pred_check_branch
      %35 = sbr.rel (0) target = $region21
    $region20: #{forward.1} parent=1 // pred_region
      _
    $region21: #{forward.1} parent=1 // pred_fallthru
      _
    // Predicated region
    $region22: #{forward.1} parent=1 // pred_check
      _
    $region23: #{forward.1} parent=1 // pred_check_branch
      %37 = sbr.rel (0) target = $region25
    $region24: #{forward.1} parent=1 // pred_region
      _
    $region25: #{forward.1} parent=1 // pred_fallthru
      _
    // Predicated region
    $region26: #{forward.1} parent=1 // pred_check
      _
    $region27: #{forward.1} parent=1 // pred_check_branch
      %39 = sbr.rel (0) target = $region29
    $region28: #{forward.1} parent=1 // pred_region
      %41 = vsyncadd [#allocation7], 0
      %s42 = sshll.u32 %s6, 4
      %s43 = int_to_ptr.hbm [resolvable:$true] %s42
      %s44 = sshll.u32 [#allocation6], 4
      %s45 = int_to_ptr.vmem [resolvable:$true] %s44
      %50 = dma.hbm_to_vmem [thread:$0]  %s43, 12288, %s45, [#allocation7], 128, 128, 8
    $region29: #{forward.1} parent=1 // pred_fallthru
      _
    // Predicated region
    $region30: #{forward.1} parent=1 // pred_check
      _
    $region31: #{forward.1} parent=1 // pred_check_branch
      %52 = sbr.rel (0) target = $region33
    $region32: #{forward.1} parent=1 // pred_region
      %54 = dma.done [#allocation4], 1536
    $region33: #{forward.1} parent=1 // pred_fallthru
      _
    // Predicated region
    $region34: #{forward.1} parent=1 // pred_check
      _
    $region35: #{forward.1} parent=1 // pred_check_branch
      %56 = sbr.rel (0) target = $region37
    $region36: #{forward.1} parent=1 // pred_region
      %58 = dma.done [#allocation7], 12288
    $region37: #{forward.1} parent=1 // pred_fallthru
      _
    %v60 = vld [vmem:[%s0] sm:$0xf]
    %v61 = vld [vmem:[%s0 + $0x4] sm:$0xf]
    %v62 = vld [vmem:[%s0 + $0x8] sm:$0xf]
    %v63 = vld [vmem:[%s0 + $0xc] sm:$0x7]
    %v64 = vld [vmem:[#allocation3] sm:$0xf]
    %v65 = vld [vmem:[#allocation3 + $0x4] sm:$0xf]
    %v66 = vld [vmem:[#allocation3 + $0x8] sm:$0xf]
    %v67 = vld [vmem:[#allocation3 + $0xc] sm:$0xf]
    %v68 = vld [vmem:[#allocation3 + $0x10] sm:$0xf]
    %v69 = vld [vmem:[#allocation3 + $0x14] sm:$0xf]
    %v70 = vld [vmem:[#allocation3 + $0x18] sm:$0xf]
    %v71 = vld [vmem:[#allocation3 + $0x1c] sm:$0xf]
    %v72 = vld [vmem:[%s0 + $0xc] sm:$0xf]
    %s73 = scalar_lea.vmem [#allocation3], 32
    %v74 = vld [vmem:[%s73] sm:$0xf]
    %v75 = vld [vmem:[%s73 + $0x4] sm:$0xf]
    %v76 = vld [vmem:[%s73 + $0x8] sm:$0xf]
    %v77 = vld [vmem:[%s73 + $0xc] sm:$0xf]
    %v78 = vld [vmem:[%s73 + $0x10] sm:$0xf]
    %v79 = vld [vmem:[%s73 + $0x14] sm:$0xf]
    %v80 = vld [vmem:[%s73 + $0x18] sm:$0xf]
    %v81 = vld [vmem:[%s73 + $0x1c] sm:$0xf]
    %v86 = vunpack.c.l.b16 %v60
    %v87 = vunpack.c.l.b16 %v61
    %v88 = vunpack.c.l.b16 %v62
    %v89 = vunpack.c.l.b16 %v72
    %v90 = vpack.c.b16 %v87, %v86
    %v91 = vpack.c.b16 %v89, %v88
    %vm92 = vsmask.f32 7424
    %v94 = vshrl.u32 %v90, 16
    %v96 = vshll.u32 %v90, 16
    %v98 = vrot.slane %v96, 1
    %v99 = vor.u32 %v94, %v98
    %v101 = vshll.u32 %v91, 16
    %v103 = vrot.slane %v101, 1
    %v104 = vsel %vm92, %v99, %v103
    %v105 = vshrl.u32 %v91, 16
    %v107 = vor.u32 %v105, %v103
    %v116 = vunpack.c.l.b16 %v74
    %v117 = vunpack.c.l.b16 %v75
    %v118 = vunpack.c.l.b16 %v76
    %v119 = vunpack.c.l.b16 %v77
    %v120 = vunpack.c.l.b16 %v78
    %v121 = vunpack.c.l.b16 %v79
    %v122 = vunpack.c.l.b16 %v80
    %v123 = vunpack.c.l.b16 %v81
    %v124 = vpack.c.b16 %v117, %v116
    %v125 = vpack.c.b16 %v119, %v118
    %v126 = vpack.c.b16 %v121, %v120
    %v127 = vpack.c.b16 %v123, %v122
    %vm132 = vcmask 523264
    %v134 = vsel %vm132, %v104, 0
    %v137 = vsel %vm132, %v107, 0
    %139 = vmatpush.bf16.msra.mxu0 0
    %140 = vmatpush.bf16.msra.mxu0 0
    %141 = vmatpush.bf16.msra.mxu0 0
    %142 = vmatpush.bf16.msra.mxu0 0
    %143 = vmatpush.bf16.msra.mxu0 %v127
    %144 = vmatpush.bf16.msra.mxu0 %v126
    %145 = vmatpush.bf16.msra.mxu0 %v125
    %146 = vmatpush.bf16.msra.mxu0 %v124
    %147 = vmatmul.bf16.gmra.mxu0 %v134
    %v148 = vpop.f32.mrf.mxu0
    %v149 = vadd.f32 0.0, %v148
    %v150 = vpop.f32.mrf.mxu0
    %v151 = vadd.f32 0.0, %v150
    %152 = vmatmul.bf16.gmra.mxu0 %v137
    %v153 = vpop.f32.mrf.mxu0
    %v154 = vadd.f32 0.0, %v153
    %v155 = vpop.f32.mrf.mxu0
    %v156 = vadd.f32 0.0, %v155
    %157 = vdwg.mxu0
    %v159 = vunpack.c.l.b16 %v63
    %v160 = vpack.c.b16 %v159, %v88
    %v169 = vunpack.c.l.b16 %v64
    %v170 = vunpack.c.l.b16 %v65
    %v171 = vunpack.c.l.b16 %v66
    %v172 = vunpack.c.l.b16 %v67
    %v173 = vunpack.c.l.b16 %v68
    %v174 = vunpack.c.l.b16 %v69
    %v175 = vunpack.c.l.b16 %v70
    %v176 = vunpack.c.l.b16 %v71
    %v177 = vpack.c.b16 %v170, %v169
    %v178 = vpack.c.b16 %v172, %v171
    %v179 = vpack.c.b16 %v174, %v173
    %v180 = vpack.c.b16 %v176, %v175
    %v185 = vsel %vm132, %v90, 0
    %v188 = vsel %vm132, %v160, 0
    %190 = vmatpush.bf16.msra.mxu0 0
    %191 = vmatpush.bf16.msra.mxu0 0
    %192 = vmatpush.bf16.msra.mxu0 0
    %193 = vmatpush.bf16.msra.mxu0 0
    %194 = vmatpush.bf16.msra.mxu0 %v180
    %195 = vmatpush.bf16.msra.mxu0 %v179
    %196 = vmatpush.bf16.msra.mxu0 %v178
    %197 = vmatpush.bf16.msra.mxu0 %v177
    %198 = vmatmul.bf16.gmra.mxu0 %v185
    %v199 = vpop.f32.mrf.mxu0
    %v200 = vadd.f32 %v149, %v199
    %v201 = vpop.f32.mrf.mxu0
    %v202 = vadd.f32 %v151, %v201
    %203 = vmatmul.bf16.gmra.mxu0 %v188
    %v204 = vpop.f32.mrf.mxu0
    %v205 = vadd.f32 %v154, %v204
    %v206 = vpop.f32.mrf.mxu0
    %v207 = vadd.f32 %v156, %v206
    %208 = vdwg.mxu0
    %v209 = vld [vmem:[%s0] sm:$0xe]
    %s210 = scalar_lea.vmem [#allocation3], 64
    %v211 = vld [vmem:[%s210] sm:$0xf]
    %v212 = vld [vmem:[%s210 + $0x4] sm:$0xf]
    %v213 = vld [vmem:[%s210 + $0x8] sm:$0xf]
    %v214 = vld [vmem:[%s210 + $0xc] sm:$0xf]
    %v215 = vld [vmem:[%s210 + $0x10] sm:$0xf]
    %v216 = vld [vmem:[%s210 + $0x14] sm:$0xf]
    %v217 = vld [vmem:[%s210 + $0x18] sm:$0xf]
    %v218 = vld [vmem:[%s210 + $0x1c] sm:$0xf]
    %v220 = vunpack.c.l.b16 %v209
    %v221 = vpack.c.b16 %v87, %v220
    %vm222 = vcmask 1046528
    %v223 = vrot.slane %v221, 1
    %v224 = vrot.slane %v91, 1
    %v225 = vsel %vm222, %v223, %v224
    %v234 = vunpack.c.l.b16 %v211
    %v235 = vunpack.c.l.b16 %v212
    %v236 = vunpack.c.l.b16 %v213
    %v237 = vunpack.c.l.b16 %v214
    %v238 = vunpack.c.l.b16 %v215
    %v239 = vunpack.c.l.b16 %v216
    %v240 = vunpack.c.l.b16 %v217
    %v241 = vunpack.c.l.b16 %v218
    %v242 = vpack.c.b16 %v235, %v234
    %v243 = vpack.c.b16 %v237, %v236
    %v244 = vpack.c.b16 %v239, %v238
    %v245 = vpack.c.b16 %v241, %v240
    %v251 = vsel %vm132, %v225, 0
    %v254 = vsel %vm132, %v224, 0
    %256 = vmatpush.bf16.msra.mxu0 0
    %257 = vmatpush.bf16.msra.mxu0 0
    %258 = vmatpush.bf16.msra.mxu0 0
    %259 = vmatpush.bf16.msra.mxu0 0
    %260 = vmatpush.bf16.msra.mxu0 %v245
    %261 = vmatpush.bf16.msra.mxu0 %v244
    %262 = vmatpush.bf16.msra.mxu0 %v243
    %263 = vmatpush.bf16.msra.mxu0 %v242
    %264 = vmatmul.bf16.gmra.mxu0 %v251
    %v265 = vpop.f32.mrf.mxu0
    %v266 = vadd.f32 0.0, %v265
    %v267 = vpop.f32.mrf.mxu0
    %v268 = vadd.f32 0.0, %v267
    %269 = vmatmul.bf16.gmra.mxu0 %v254
    %v270 = vpop.f32.mrf.mxu0
    %v271 = vadd.f32 0.0, %v270
    %v272 = vpop.f32.mrf.mxu0
    %v273 = vadd.f32 0.0, %v272
    %274 = vdwg.mxu0
    %v275 = vadd.f32 %v200, %v266
    %v276 = vadd.f32 %v202, %v268
    %v277 = vadd.f32 %v205, %v271
    %v278 = vadd.f32 %v207, %v273
    %v279 = vld [vmem:[%s2] sm:$0x1]
    %v281 = vperm.slane %v279, 0
    %v283 = vadd.f32 %v275, %v281
    %v284 = vadd.f32 %v276, %v281
    %v285 = vadd.f32 %v277, %v281
    %v286 = vadd.f32 %v278, %v281
    %v287 = vmax.f32 %v283, 0.0
    %v288 = vmax.f32 %v284, 0.0
    %v289 = vmax.f32 %v285, 0.0
    %v290 = vmax.f32 %v286, 0.0
    %v291 = vpack.c.bf16 %v287, %v287
    %v292 = vpack.c.bf16 %v288, %v288
    %v293 = vpack.c.bf16 %v289, %v289
    %v294 = vpack.c.bf16 %v290, %v290
    %295 = vst [vmem:[#allocation2] sm:$0xf] %v291
    %296 = vst [vmem:[#allocation2 + $0x4] sm:$0xf] %v292
    %297 = vst [vmem:[#allocation2 + $0x8] sm:$0xf] %v293
    %298 = vst [vmem:[#allocation2 + $0xc] sm:$0x7] %v294
    %v299 = vld [vmem:[#allocation2] sm:$0xf]
    %v300 = vld [vmem:[#allocation2 + $0x4] sm:$0xf]
    %v301 = vld [vmem:[#allocation2 + $0x8] sm:$0xf]
    %v302 = vld [vmem:[#allocation2 + $0xc] sm:$0x3]
    %v303 = vld [vmem:[%s3] sm:$0xff]
    %v304 = vld [vmem:[%s3 + $0x8] sm:$0xff]
    %v305 = vld [vmem:[%s3 + $0x10] sm:$0xff]
    %v306 = vld [vmem:[%s3 + $0x18] sm:$0xff]
    %v307 = vld [vmem:[%s3 + $0x20] sm:$0xff]
    %v308 = vld [vmem:[%s3 + $0x28] sm:$0xff]
    %v309 = vld [vmem:[%s3 + $0x30] sm:$0xff]
    %v310 = vld [vmem:[%s3 + $0x38] sm:$0xff]
    %v311 = vld [vmem:[%s3 + $0x40] sm:$0xff]
    %v312 = vld [vmem:[%s3 + $0x48] sm:$0xff]
    %v313 = vld [vmem:[%s3 + $0x50] sm:$0xff]
    %v314 = vld [vmem:[%s3 + $0x58] sm:$0xff]
    %v315 = vld [vmem:[%s3 + $0x60] sm:$0xff]
    %v316 = vld [vmem:[%s3 + $0x68] sm:$0xff]
    %v317 = vld [vmem:[%s3 + $0x70] sm:$0xff]
    %v318 = vld [vmem:[%s3 + $0x78] sm:$0xff]
    %v319 = vld [vmem:[#allocation2 + $0xc] sm:$0x7]
    %s320 = scalar_lea.vmem %s3, 128
    %v321 = vld [vmem:[%s320] sm:$0xff]
    %v322 = vld [vmem:[%s320 + $0x8] sm:$0xff]
    %v323 = vld [vmem:[%s320 + $0x10] sm:$0xff]
    %v324 = vld [vmem:[%s320 + $0x18] sm:$0xff]
    %v325 = vld [vmem:[%s320 + $0x20] sm:$0xff]
    %v326 = vld [vmem:[%s320 + $0x28] sm:$0xff]
    %v327 = vld [vmem:[%s320 + $0x30] sm:$0xff]
    %v328 = vld [vmem:[%s320 + $0x38] sm:$0xff]
    %v329 = vld [vmem:[%s320 + $0x40] sm:$0xff]
    %v330 = vld [vmem:[%s320 + $0x48] sm:$0xff]
    %v331 = vld [vmem:[%s320 + $0x50] sm:$0xff]
    %v332 = vld [vmem:[%s320 + $0x58] sm:$0xff]
    %v333 = vld [vmem:[%s320 + $0x60] sm:$0xff]
    %v334 = vld [vmem:[%s320 + $0x68] sm:$0xff]
    %v335 = vld [vmem:[%s320 + $0x70] sm:$0xff]
    %v336 = vld [vmem:[%s320 + $0x78] sm:$0xff]
    %v341 = vunpack.c.l.b16 %v299
    %v342 = vunpack.c.l.b16 %v300
    %v343 = vunpack.c.l.b16 %v301
    %v344 = vunpack.c.l.b16 %v319
    %v345 = vpack.c.b16 %v342, %v341
    %v346 = vpack.c.b16 %v344, %v343
    %v348 = vshrl.u32 %v345, 16
    %v350 = vshll.u32 %v345, 16
    %v352 = vrot.slane %v350, 1
    %v353 = vor.u32 %v348, %v352
    %v355 = vshll.u32 %v346, 16
    %v357 = vrot.slane %v355, 1
    %v358 = vsel %vm92, %v353, %v357
    %v359 = vshrl.u32 %v346, 16
    %v361 = vor.u32 %v359, %v357
    %v380 = vunpack.c.l.b16 %v321
    %v381 = vunpack.c.h.b16 %v321
    %v382 = vunpack.c.l.b16 %v322
    %v383 = vunpack.c.h.b16 %v322
    %v384 = vunpack.c.l.b16 %v323
    %v385 = vunpack.c.h.b16 %v323
    %v386 = vunpack.c.l.b16 %v324
    %v387 = vunpack.c.h.b16 %v324
    %v388 = vunpack.c.l.b16 %v325
    %v389 = vunpack.c.h.b16 %v325
    %v390 = vunpack.c.l.b16 %v326
    %v391 = vunpack.c.h.b16 %v326
    %v392 = vunpack.c.l.b16 %v327
    %v393 = vunpack.c.h.b16 %v327
    %v394 = vunpack.c.l.b16 %v328
    %v395 = vunpack.c.h.b16 %v328
    %v396 = vunpack.c.l.b16 %v329
    %v397 = vunpack.c.h.b16 %v329
    %v398 = vunpack.c.l.b16 %v330
    %v399 = vunpack.c.h.b16 %v330
    %v400 = vunpack.c.l.b16 %v331
    %v401 = vunpack.c.h.b16 %v331
    %v402 = vunpack.c.l.b16 %v332
    %v403 = vunpack.c.h.b16 %v332
    %v404 = vunpack.c.l.b16 %v333
    %v405 = vunpack.c.h.b16 %v333
    %v406 = vunpack.c.l.b16 %v334
    %v407 = vunpack.c.h.b16 %v334
    %v408 = vunpack.c.l.b16 %v335
    %v409 = vunpack.c.h.b16 %v335
    %v410 = vunpack.c.l.b16 %v336
    %v411 = vunpack.c.h.b16 %v336
    %v412 = vpack.c.b16 %v382, %v380
    %v413 = vpack.c.b16 %v383, %v381
    %v414 = vpack.c.b16 %v386, %v384
    %v415 = vpack.c.b16 %v387, %v385
    %v416 = vpack.c.b16 %v390, %v388
    %v417 = vpack.c.b16 %v391, %v389
    %v418 = vpack.c.b16 %v394, %v392
    %v419 = vpack.c.b16 %v395, %v393
    %v420 = vpack.c.b16 %v398, %v396
    %v421 = vpack.c.b16 %v399, %v397
    %v422 = vpack.c.b16 %v402, %v400
    %v423 = vpack.c.b16 %v403, %v401
    %v424 = vpack.c.b16 %v406, %v404
    %v425 = vpack.c.b16 %v407, %v405
    %v426 = vpack.c.b16 %v410, %v408
    %v427 = vpack.c.b16 %v411, %v409
    %444 = vmatpush.bf16.msra.mxu0 %v426
    %445 = vmatpush.bf16.msra.mxu0 %v424
    %446 = vmatpush.bf16.msra.mxu0 %v422
    %447 = vmatpush.bf16.msra.mxu0 %v420
    %448 = vmatpush.bf16.msra.mxu0 %v418
    %449 = vmatpush.bf16.msra.mxu0 %v416
    %450 = vmatpush.bf16.msra.mxu0 %v414
    %451 = vmatpush.bf16.msra.mxu0 %v412
    %452 = vmatmul.bf16.gmra.mxu0 %v358
    %v453 = vpop.f32.mrf.mxu0
    %v454 = vadd.f32 0.0, %v453
    %v455 = vpop.f32.mrf.mxu0
    %v456 = vadd.f32 0.0, %v455
    %457 = vmatmul.bf16.gmra.mxu0 %v361
    %v458 = vpop.f32.mrf.mxu0
    %v459 = vadd.f32 0.0, %v458
    %v460 = vpop.f32.mrf.mxu0
    %v461 = vadd.f32 0.0, %v460
    %462 = vdwg.mxu0
    %463 = vmatpush.bf16.msra.mxu0 %v427
    %464 = vmatpush.bf16.msra.mxu0 %v425
    %465 = vmatpush.bf16.msra.mxu0 %v423
    %466 = vmatpush.bf16.msra.mxu0 %v421
    %467 = vmatpush.bf16.msra.mxu0 %v419
    %468 = vmatpush.bf16.msra.mxu0 %v417
    %469 = vmatpush.bf16.msra.mxu0 %v415
    %470 = vmatpush.bf16.msra.mxu0 %v413
    %471 = vmatmul.bf16.gmra.mxu0 %v358
    %v472 = vpop.f32.mrf.mxu0
    %v473 = vadd.f32 0.0, %v472
    %v474 = vpop.f32.mrf.mxu0
    %v475 = vadd.f32 0.0, %v474
    %476 = vmatmul.bf16.gmra.mxu0 %v361
    %v477 = vpop.f32.mrf.mxu0
    %v478 = vadd.f32 0.0, %v477
    %v479 = vpop.f32.mrf.mxu0
    %v480 = vadd.f32 0.0, %v479
    %481 = vdwg.mxu0
    %v483 = vunpack.c.l.b16 %v302
    %v484 = vpack.c.b16 %v483, %v343
    %v503 = vunpack.c.l.b16 %v303
    %v504 = vunpack.c.h.b16 %v303
    %v505 = vunpack.c.l.b16 %v304
    %v506 = vunpack.c.h.b16 %v304
    %v507 = vunpack.c.l.b16 %v305
    %v508 = vunpack.c.h.b16 %v305
    %v509 = vunpack.c.l.b16 %v306
    %v510 = vunpack.c.h.b16 %v306
    %v511 = vunpack.c.l.b16 %v307
    %v512 = vunpack.c.h.b16 %v307
    %v513 = vunpack.c.l.b16 %v308
    %v514 = vunpack.c.h.b16 %v308
    %v515 = vunpack.c.l.b16 %v309
    %v516 = vunpack.c.h.b16 %v309
    %v517 = vunpack.c.l.b16 %v310
    %v518 = vunpack.c.h.b16 %v310
    %v519 = vunpack.c.l.b16 %v311
    %v520 = vunpack.c.h.b16 %v311
    %v521 = vunpack.c.l.b16 %v312
    %v522 = vunpack.c.h.b16 %v312
    %v523 = vunpack.c.l.b16 %v313
    %v524 = vunpack.c.h.b16 %v313
    %v525 = vunpack.c.l.b16 %v314
    %v526 = vunpack.c.h.b16 %v314
    %v527 = vunpack.c.l.b16 %v315
    %v528 = vunpack.c.h.b16 %v315
    %v529 = vunpack.c.l.b16 %v316
    %v530 = vunpack.c.h.b16 %v316
    %v531 = vunpack.c.l.b16 %v317
    %v532 = vunpack.c.h.b16 %v317
    %v533 = vunpack.c.l.b16 %v318
    %v534 = vunpack.c.h.b16 %v318
    %v535 = vpack.c.b16 %v505, %v503
    %v536 = vpack.c.b16 %v506, %v504
    %v537 = vpack.c.b16 %v509, %v507
    %v538 = vpack.c.b16 %v510, %v508
    %v539 = vpack.c.b16 %v513, %v511
    %v540 = vpack.c.b16 %v514, %v512
    %v541 = vpack.c.b16 %v517, %v515
    %v542 = vpack.c.b16 %v518, %v516
    %v543 = vpack.c.b16 %v521, %v519
    %v544 = vpack.c.b16 %v522, %v520
    %v545 = vpack.c.b16 %v525, %v523
    %v546 = vpack.c.b16 %v526, %v524
    %v547 = vpack.c.b16 %v529, %v527
    %v548 = vpack.c.b16 %v530, %v528
    %v549 = vpack.c.b16 %v533, %v531
    %v550 = vpack.c.b16 %v534, %v532
    %567 = vmatpush.bf16.msra.mxu0 %v549
    %568 = vmatpush.bf16.msra.mxu0 %v547
    %569 = vmatpush.bf16.msra.mxu0 %v545
    %570 = vmatpush.bf16.msra.mxu0 %v543
    %571 = vmatpush.bf16.msra.mxu0 %v541
    %572 = vmatpush.bf16.msra.mxu0 %v539
    %573 = vmatpush.bf16.msra.mxu0 %v537
    %574 = vmatpush.bf16.msra.mxu0 %v535
    %575 = vmatmul.bf16.gmra.mxu0 %v345
    %v576 = vpop.f32.mrf.mxu0
    %v577 = vadd.f32 %v454, %v576
    %v578 = vpop.f32.mrf.mxu0
    %v579 = vadd.f32 %v456, %v578
    %580 = vmatmul.bf16.gmra.mxu0 %v484
    %v581 = vpop.f32.mrf.mxu0
    %v582 = vadd.f32 %v459, %v581
    %v583 = vpop.f32.mrf.mxu0
    %v584 = vadd.f32 %v461, %v583
    %585 = vdwg.mxu0
    %586 = vmatpush.bf16.msra.mxu0 %v550
    %587 = vmatpush.bf16.msra.mxu0 %v548
    %588 = vmatpush.bf16.msra.mxu0 %v546
    %589 = vmatpush.bf16.msra.mxu0 %v544
    %590 = vmatpush.bf16.msra.mxu0 %v542
    %591 = vmatpush.bf16.msra.mxu0 %v540
    %592 = vmatpush.bf16.msra.mxu0 %v538
    %593 = vmatpush.bf16.msra.mxu0 %v536
    %594 = vmatmul.bf16.gmra.mxu0 %v345
    %v595 = vpop.f32.mrf.mxu0
    %v596 = vadd.f32 %v473, %v595
    %v597 = vpop.f32.mrf.mxu0
    %v598 = vadd.f32 %v475, %v597
    %599 = vmatmul.bf16.gmra.mxu0 %v484
    %v600 = vpop.f32.mrf.mxu0
    %v601 = vadd.f32 %v478, %v600
    %v602 = vpop.f32.mrf.mxu0
    %v603 = vadd.f32 %v480, %v602
    %604 = vdwg.mxu0
    %v605 = vld [vmem:[#allocation2] sm:$0xe]
    %s606 = scalar_lea.vmem %s3, 256
    %v607 = vld [vmem:[%s606] sm:$0xff]
    %v608 = vld [vmem:[%s606 + $0x8] sm:$0xff]
    %v609 = vld [vmem:[%s606 + $0x10] sm:$0xff]
    %v610 = vld [vmem:[%s606 + $0x18] sm:$0xff]
    %v611 = vld [vmem:[%s606 + $0x20] sm:$0xff]
    %v612 = vld [vmem:[%s606 + $0x28] sm:$0xff]
    %v613 = vld [vmem:[%s606 + $0x30] sm:$0xff]
    %v614 = vld [vmem:[%s606 + $0x38] sm:$0xff]
    %v615 = vld [vmem:[%s606 + $0x40] sm:$0xff]
    %v616 = vld [vmem:[%s606 + $0x48] sm:$0xff]
    %v617 = vld [vmem:[%s606 + $0x50] sm:$0xff]
    %v618 = vld [vmem:[%s606 + $0x58] sm:$0xff]
    %v619 = vld [vmem:[%s606 + $0x60] sm:$0xff]
    %v620 = vld [vmem:[%s606 + $0x68] sm:$0xff]
    %v621 = vld [vmem:[%s606 + $0x70] sm:$0xff]
    %v622 = vld [vmem:[%s606 + $0x78] sm:$0xff]
    %v624 = vunpack.c.l.b16 %v605
    %v625 = vpack.c.b16 %v342, %v624
    %v626 = vrot.slane %v625, 1
    %v627 = vrot.slane %v346, 1
    %v628 = vsel %vm222, %v626, %v627
    %v647 = vunpack.c.l.b16 %v607
    %v648 = vunpack.c.h.b16 %v607
    %v649 = vunpack.c.l.b16 %v608
    %v650 = vunpack.c.h.b16 %v608
    %v651 = vunpack.c.l.b16 %v609
    %v652 = vunpack.c.h.b16 %v609
    %v653 = vunpack.c.l.b16 %v610
    %v654 = vunpack.c.h.b16 %v610
    %v655 = vunpack.c.l.b16 %v611
    %v656 = vunpack.c.h.b16 %v611
    %v657 = vunpack.c.l.b16 %v612
    %v658 = vunpack.c.h.b16 %v612
    %v659 = vunpack.c.l.b16 %v613
    %v660 = vunpack.c.h.b16 %v613
    %v661 = vunpack.c.l.b16 %v614
    %v662 = vunpack.c.h.b16 %v614
    %v663 = vunpack.c.l.b16 %v615
    %v664 = vunpack.c.h.b16 %v615
    %v665 = vunpack.c.l.b16 %v616
    %v666 = vunpack.c.h.b16 %v616
    %v667 = vunpack.c.l.b16 %v617
    %v668 = vunpack.c.h.b16 %v617
    %v669 = vunpack.c.l.b16 %v618
    %v670 = vunpack.c.h.b16 %v618
    %v671 = vunpack.c.l.b16 %v619
    %v672 = vunpack.c.h.b16 %v619
    %v673 = vunpack.c.l.b16 %v620
    %v674 = vunpack.c.h.b16 %v620
    %v675 = vunpack.c.l.b16 %v621
    %v676 = vunpack.c.h.b16 %v621
    %v677 = vunpack.c.l.b16 %v622
    %v678 = vunpack.c.h.b16 %v622
    %v679 = vpack.c.b16 %v649, %v647
    %v680 = vpack.c.b16 %v650, %v648
    %v681 = vpack.c.b16 %v653, %v651
    %v682 = vpack.c.b16 %v654, %v652
    %v683 = vpack.c.b16 %v657, %v655
    %v684 = vpack.c.b16 %v658, %v656
    %v685 = vpack.c.b16 %v661, %v659
    %v686 = vpack.c.b16 %v662, %v660
    %v687 = vpack.c.b16 %v665, %v663
    %v688 = vpack.c.b16 %v666, %v664
    %v689 = vpack.c.b16 %v669, %v667
    %v690 = vpack.c.b16 %v670, %v668
    %v691 = vpack.c.b16 %v673, %v671
    %v692 = vpack.c.b16 %v674, %v672
    %v693 = vpack.c.b16 %v677, %v675
    %v694 = vpack.c.b16 %v678, %v676
    %711 = vmatpush.bf16.msra.mxu0 %v693
    %712 = vmatpush.bf16.msra.mxu0 %v691
    %713 = vmatpush.bf16.msra.mxu0 %v689
    %714 = vmatpush.bf16.msra.mxu0 %v687
    %715 = vmatpush.bf16.msra.mxu0 %v685
    %716 = vmatpush.bf16.msra.mxu0 %v683
    %717 = vmatpush.bf16.msra.mxu0 %v681
    %718 = vmatpush.bf16.msra.mxu0 %v679
    %719 = vmatmul.bf16.gmra.mxu0 %v628
    %v720 = vpop.f32.mrf.mxu0
    %v721 = vadd.f32 0.0, %v720
    %v722 = vpop.f32.mrf.mxu0
    %v723 = vadd.f32 0.0, %v722
    %724 = vmatmul.bf16.gmra.mxu0 %v627
    %v725 = vpop.f32.mrf.mxu0
    %v726 = vadd.f32 0.0, %v725
    %v727 = vpop.f32.mrf.mxu0
    %v728 = vadd.f32 0.0, %v727
    %729 = vdwg.mxu0
    %730 = vmatpush.bf16.msra.mxu0 %v694
    %731 = vmatpush.bf16.msra.mxu0 %v692
    %732 = vmatpush.bf16.msra.mxu0 %v690
    %733 = vmatpush.bf16.msra.mxu0 %v688
    %734 = vmatpush.bf16.msra.mxu0 %v686
    %735 = vmatpush.bf16.msra.mxu0 %v684
    %736 = vmatpush.bf16.msra.mxu0 %v682
    %737 = vmatpush.bf16.msra.mxu0 %v680
    %738 = vmatmul.bf16.gmra.mxu0 %v628
    %v739 = vpop.f32.mrf.mxu0
    %v740 = vadd.f32 0.0, %v739
    %v741 = vpop.f32.mrf.mxu0
    %v742 = vadd.f32 0.0, %v741
    %743 = vmatmul.bf16.gmra.mxu0 %v627
    %v744 = vpop.f32.mrf.mxu0
    %v745 = vadd.f32 0.0, %v744
    %v746 = vpop.f32.mrf.mxu0
    %v747 = vadd.f32 0.0, %v746
    %748 = vdwg.mxu0
    %v749 = vadd.f32 %v577, %v721
    %v750 = vadd.f32 %v596, %v740
    %v751 = vadd.f32 %v579, %v723
    %v752 = vadd.f32 %v598, %v742
    %v753 = vadd.f32 %v582, %v726
    %v754 = vadd.f32 %v601, %v745
    %v755 = vadd.f32 %v584, %v728
    %v756 = vadd.f32 %v603, %v747
    %v757 = vld [vmem:[%s4] sm:$0x3]
    %v759 = vperm.slane %v757, 0
    %v760 = vperm.slane %v757, 1
    %v763 = vadd.f32 %v749, %v759
    %v764 = vadd.f32 %v750, %v760
    %v765 = vadd.f32 %v751, %v759
    %v766 = vadd.f32 %v752, %v760
    %v767 = vadd.f32 %v753, %v759
    %v768 = vadd.f32 %v754, %v760
    %v769 = vadd.f32 %v755, %v759
    %v770 = vadd.f32 %v756, %v760
    %v771 = vmax.f32 %v763, 0.0
    %v772 = vmax.f32 %v764, 0.0
    %v773 = vmax.f32 %v765, 0.0
    %v774 = vmax.f32 %v766, 0.0
    %v775 = vmax.f32 %v767, 0.0
    %v776 = vmax.f32 %v768, 0.0
    %v777 = vmax.f32 %v769, 0.0
    %v778 = vmax.f32 %v770, 0.0
    %v779 = vld [vmem:[%s5] sm:$0x3]
    %vm780 = vcmask 228352
    %v782 = vsel %vm780, %v779, 0
    %vm784 = vcmask 1043456
    %v786 = vsel %vm784, %v777, 0
    %v789 = vsel %vm784, %v778, 0
    %791 = vmatpush.msra.mxu0 0.0
    %792 = vmatpush.msra.mxu0 0.0
    %793 = vmatpush.msra.mxu0 0.0
    %794 = vmatpush.msra.mxu0 0.0
    %795 = vmatpush.msra.mxu0 0.0
    %796 = vmatpush.msra.mxu0 0.0
    %797 = vmatpush.msra.mxu0 0.0
    %798 = vmatpush.msra.mxu0 0.0
    %799 = vmatpush.msra.mxu0 0.0
    %800 = vmatpush.msra.mxu0 0.0
    %801 = vmatpush.msra.mxu0 0.0
    %802 = vmatpush.msra.mxu0 0.0
    %803 = vmatpush.msra.mxu0 %v786
    %804 = vmatpush.msra.mxu0 %v775
    %805 = vmatpush.msra.mxu0 %v773
    %806 = vmatpush.msra.mxu0 %v771
    %807 = vmatmul.f32.gmra.mxu0 %v782
    %v808 = vpop.f32.mrf.mxu0
    %v809 = vadd.f32 0.0, %v808
    %810 = vdwg.mxu0
    %811 = vmatpush.msra.mxu0 0.0
    %812 = vmatpush.msra.mxu0 0.0
    %813 = vmatpush.msra.mxu0 0.0
    %814 = vmatpush.msra.mxu0 0.0
    %815 = vmatpush.msra.mxu0 0.0
    %816 = vmatpush.msra.mxu0 0.0
    %817 = vmatpush.msra.mxu0 0.0
    %818 = vmatpush.msra.mxu0 0.0
    %819 = vmatpush.msra.mxu0 0.0
    %820 = vmatpush.msra.mxu0 0.0
    %821 = vmatpush.msra.mxu0 0.0
    %822 = vmatpush.msra.mxu0 0.0
    %823 = vmatpush.msra.mxu0 %v789
    %824 = vmatpush.msra.mxu0 %v776
    %825 = vmatpush.msra.mxu0 %v774
    %826 = vmatpush.msra.mxu0 %v772
    %827 = vmatmul.f32.gmra.mxu0 %v782
    %v828 = vpop.f32.mrf.mxu0
    %v829 = vadd.f32 0.0, %v828
    %830 = vdwg.mxu0
    %v831 = vld [vmem:[#allocation6] sm:$0xff]
    %v832 = vld [vmem:[#allocation6 + $0x8] sm:$0xff]
    %v833 = vld [vmem:[#allocation6 + $0x10] sm:$0xff]
    %v834 = vld [vmem:[#allocation6 + $0x18] sm:$0xff]
    %v835 = vld [vmem:[#allocation6 + $0x20] sm:$0xff]
    %v836 = vld [vmem:[#allocation6 + $0x28] sm:$0xff]
    %v837 = vld [vmem:[#allocation6 + $0x30] sm:$0xff]
    %v838 = vld [vmem:[#allocation6 + $0x38] sm:$0xff]
    %v839 = vld [vmem:[#allocation6 + $0x40] sm:$0xff]
    %v840 = vld [vmem:[#allocation6 + $0x48] sm:$0xff]
    %v841 = vld [vmem:[#allocation6 + $0x50] sm:$0xff]
    %v842 = vld [vmem:[#allocation6 + $0x58] sm:$0xff]
    %v843 = vld [vmem:[#allocation6 + $0x60] sm:$0xff]
    %v844 = vld [vmem:[#allocation6 + $0x68] sm:$0xff]
    %v845 = vld [vmem:[#allocation6 + $0x70] sm:$0xff]
    %v846 = vld [vmem:[#allocation6 + $0x78] sm:$0xff]
    %v847 = vld [vmem:[#allocation6 + $0x80] sm:$0xff]
    %v848 = vld [vmem:[#allocation6 + $0x88] sm:$0xff]
    %v849 = vld [vmem:[#allocation6 + $0x90] sm:$0xff]
    %v850 = vld [vmem:[#allocation6 + $0x98] sm:$0xff]
    %v851 = vld [vmem:[#allocation6 + $0xa0] sm:$0xff]
    %v852 = vld [vmem:[#allocation6 + $0xa8] sm:$0xff]
    %v853 = vld [vmem:[#allocation6 + $0xb0] sm:$0xff]
    %v854 = vld [vmem:[#allocation6 + $0xb8] sm:$0xff]
    %v855 = vld [vmem:[#allocation6 + $0xc0] sm:$0xff]
    %v856 = vld [vmem:[#allocation6 + $0xc8] sm:$0xff]
    %v857 = vld [vmem:[#allocation6 + $0xd0] sm:$0xff]
    %v858 = vld [vmem:[#allocation6 + $0xd8] sm:$0xff]
    %v859 = vld [vmem:[#allocation6 + $0xe0] sm:$0xff]
    %v860 = vld [vmem:[#allocation6 + $0xe8] sm:$0xff]
    %v861 = vld [vmem:[#allocation6 + $0xf0] sm:$0xff]
    %v862 = vld [vmem:[#allocation6 + $0xf8] sm:$0xff]
    %s863 = scalar_lea.vmem %s5, 2
    %v864 = vld [vmem:[%s863] sm:$0x3]
    %v866 = vsel %vm780, %v864, 0
    %868 = vmatpush.msra.mxu0 0.0
    %869 = vmatpush.msra.mxu0 0.0
    %870 = vmatpush.msra.mxu0 0.0
    %871 = vmatpush.msra.mxu0 0.0
    %872 = vmatpush.msra.mxu0 0.0
    %873 = vmatpush.msra.mxu0 0.0
    %874 = vmatpush.msra.mxu0 0.0
    %875 = vmatpush.msra.mxu0 0.0
    %876 = vmatpush.msra.mxu0 0.0
    %877 = vmatpush.msra.mxu0 0.0
    %878 = vmatpush.msra.mxu0 0.0
    %879 = vmatpush.msra.mxu0 0.0
    %880 = vmatpush.msra.mxu0 %v786
    %881 = vmatpush.msra.mxu0 %v775
    %882 = vmatpush.msra.mxu0 %v773
    %883 = vmatpush.msra.mxu0 %v771
    %884 = vmatmul.f32.gmra.mxu0 %v866
    %v885 = vpop.f32.mrf.mxu0
    %v886 = vadd.f32 0.0, %v885
    %887 = vdwg.mxu0
    %888 = vmatpush.msra.mxu0 0.0
    %889 = vmatpush.msra.mxu0 0.0
    %890 = vmatpush.msra.mxu0 0.0
    %891 = vmatpush.msra.mxu0 0.0
    %892 = vmatpush.msra.mxu0 0.0
    %893 = vmatpush.msra.mxu0 0.0
    %894 = vmatpush.msra.mxu0 0.0
    %895 = vmatpush.msra.mxu0 0.0
    %896 = vmatpush.msra.mxu0 0.0
    %897 = vmatpush.msra.mxu0 0.0
    %898 = vmatpush.msra.mxu0 0.0
    %899 = vmatpush.msra.mxu0 0.0
    %900 = vmatpush.msra.mxu0 %v789
    %901 = vmatpush.msra.mxu0 %v776
    %902 = vmatpush.msra.mxu0 %v774
    %903 = vmatpush.msra.mxu0 %v772
    %904 = vmatmul.f32.gmra.mxu0 %v866
    %v905 = vpop.f32.mrf.mxu0
    %v906 = vadd.f32 0.0, %v905
    %907 = vdwg.mxu0
    %s908 = scalar_lea.vmem [#allocation6], 256
    %v909 = vld [vmem:[%s908] sm:$0xff]
    %v910 = vld [vmem:[%s908 + $0x8] sm:$0xff]
    %v911 = vld [vmem:[%s908 + $0x10] sm:$0xff]
    %v912 = vld [vmem:[%s908 + $0x18] sm:$0xff]
    %v913 = vld [vmem:[%s908 + $0x20] sm:$0xff]
    %v914 = vld [vmem:[%s908 + $0x28] sm:$0xff]
    %v915 = vld [vmem:[%s908 + $0x30] sm:$0xff]
    %v916 = vld [vmem:[%s908 + $0x38] sm:$0xff]
    %v917 = vld [vmem:[%s908 + $0x40] sm:$0xff]
    %v918 = vld [vmem:[%s908 + $0x48] sm:$0xff]
    %v919 = vld [vmem:[%s908 + $0x50] sm:$0xff]
    %v920 = vld [vmem:[%s908 + $0x58] sm:$0xff]
    %v921 = vld [vmem:[%s908 + $0x60] sm:$0xff]
    %v922 = vld [vmem:[%s908 + $0x68] sm:$0xff]
    %v923 = vld [vmem:[%s908 + $0x70] sm:$0xff]
    %v924 = vld [vmem:[%s908 + $0x78] sm:$0xff]
    %v925 = vld [vmem:[%s908 + $0x80] sm:$0xff]
    %v926 = vld [vmem:[%s908 + $0x88] sm:$0xff]
    %v927 = vld [vmem:[%s908 + $0x90] sm:$0xff]
    %v928 = vld [vmem:[%s908 + $0x98] sm:$0xff]
    %v929 = vld [vmem:[%s908 + $0xa0] sm:$0xff]
    %v930 = vld [vmem:[%s908 + $0xa8] sm:$0xff]
    %v931 = vld [vmem:[%s908 + $0xb0] sm:$0xff]
    %v932 = vld [vmem:[%s908 + $0xb8] sm:$0xff]
    %v933 = vld [vmem:[%s908 + $0xc0] sm:$0xff]
    %v934 = vld [vmem:[%s908 + $0xc8] sm:$0xff]
    %v935 = vld [vmem:[%s908 + $0xd0] sm:$0xff]
    %v936 = vld [vmem:[%s908 + $0xd8] sm:$0xff]
    %v937 = vld [vmem:[%s908 + $0xe0] sm:$0xff]
    %v938 = vld [vmem:[%s908 + $0xe8] sm:$0xff]
    %v939 = vld [vmem:[%s908 + $0xf0] sm:$0xff]
    %v940 = vld [vmem:[%s908 + $0xf8] sm:$0xff]
    %941 = vmatpush.msra.mxu0 %v924
    %942 = vmatpush.msra.mxu0 %v923
    %943 = vmatpush.msra.mxu0 %v922
    %944 = vmatpush.msra.mxu0 %v921
    %945 = vmatpush.msra.mxu0 %v920
    %946 = vmatpush.msra.mxu0 %v919
    %947 = vmatpush.msra.mxu0 %v918
    %948 = vmatpush.msra.mxu0 %v917
    %949 = vmatpush.msra.mxu0 %v916
    %950 = vmatpush.msra.mxu0 %v915
    %951 = vmatpush.msra.mxu0 %v914
    %952 = vmatpush.msra.mxu0 %v913
    %953 = vmatpush.msra.mxu0 %v912
    %954 = vmatpush.msra.mxu0 %v911
    %955 = vmatpush.msra.mxu0 %v910
    %956 = vmatpush.msra.mxu0 %v909
    %957 = vmatmul.f32.gmra.mxu0 %v886
    %v958 = vpop.f32.mrf.mxu0
    %v959 = vadd.f32 0.0, %v958
    %960 = vdwg.mxu0
    %961 = vmatpush.msra.mxu0 %v940
    %962 = vmatpush.msra.mxu0 %v939
    %963 = vmatpush.msra.mxu0 %v938
    %964 = vmatpush.msra.mxu0 %v937
    %965 = vmatpush.msra.mxu0 %v936
    %966 = vmatpush.msra.mxu0 %v935
    %967 = vmatpush.msra.mxu0 %v934
    %968 = vmatpush.msra.mxu0 %v933
    %969 = vmatpush.msra.mxu0 %v932
    %970 = vmatpush.msra.mxu0 %v931
    %971 = vmatpush.msra.mxu0 %v930
    %972 = vmatpush.msra.mxu0 %v929
    %973 = vmatpush.msra.mxu0 %v928
    %974 = vmatpush.msra.mxu0 %v927
    %975 = vmatpush.msra.mxu0 %v926
    %976 = vmatpush.msra.mxu0 %v925
    %977 = vmatmul.f32.gmra.mxu0 %v906
    %v978 = vpop.f32.mrf.mxu0
    %v979 = vadd.f32 %v959, %v978
    %980 = vdwg.mxu0
    %981 = vmatpush.msra.mxu0 %v846
    %982 = vmatpush.msra.mxu0 %v845
    %983 = vmatpush.msra.mxu0 %v844
    %984 = vmatpush.msra.mxu0 %v843
    %985 = vmatpush.msra.mxu0 %v842
    %986 = vmatpush.msra.mxu0 %v841
    %987 = vmatpush.msra.mxu0 %v840
    %988 = vmatpush.msra.mxu0 %v839
    %989 = vmatpush.msra.mxu0 %v838
    %990 = vmatpush.msra.mxu0 %v837
    %991 = vmatpush.msra.mxu0 %v836
    %992 = vmatpush.msra.mxu0 %v835
    %993 = vmatpush.msra.mxu0 %v834
    %994 = vmatpush.msra.mxu0 %v833
    %995 = vmatpush.msra.mxu0 %v832
    %996 = vmatpush.msra.mxu0 %v831
    %997 = vmatmul.f32.gmra.mxu0 %v809
    %v998 = vpop.f32.mrf.mxu0
    %v999 = vadd.f32 %v979, %v998
    %1000 = vdwg.mxu0
    %1001 = vmatpush.msra.mxu0 %v862
    %1002 = vmatpush.msra.mxu0 %v861
    %1003 = vmatpush.msra.mxu0 %v860
    %1004 = vmatpush.msra.mxu0 %v859
    %1005 = vmatpush.msra.mxu0 %v858
    %1006 = vmatpush.msra.mxu0 %v857
    %1007 = vmatpush.msra.mxu0 %v856
    %1008 = vmatpush.msra.mxu0 %v855
    %1009 = vmatpush.msra.mxu0 %v854
    %1010 = vmatpush.msra.mxu0 %v853
    %1011 = vmatpush.msra.mxu0 %v852
    %1012 = vmatpush.msra.mxu0 %v851
    %1013 = vmatpush.msra.mxu0 %v850
    %1014 = vmatpush.msra.mxu0 %v849
    %1015 = vmatpush.msra.mxu0 %v848
    %1016 = vmatpush.msra.mxu0 %v847
    %1017 = vmatmul.f32.gmra.mxu0 %v829
    %v1018 = vpop.f32.mrf.mxu0
    %v1019 = vadd.f32 %v999, %v1018
    %1020 = vdwg.mxu0
    %s1021 = scalar_lea.vmem %s5, 4
    %v1022 = vld [vmem:[%s1021] sm:$0x3]
    %v1024 = vsel %vm780, %v1022, 0
    %1026 = vmatpush.msra.mxu0 0.0
    %1027 = vmatpush.msra.mxu0 0.0
    %1028 = vmatpush.msra.mxu0 0.0
    %1029 = vmatpush.msra.mxu0 0.0
    %1030 = vmatpush.msra.mxu0 0.0
    %1031 = vmatpush.msra.mxu0 0.0
    %1032 = vmatpush.msra.mxu0 0.0
    %1033 = vmatpush.msra.mxu0 0.0
    %1034 = vmatpush.msra.mxu0 0.0
    %1035 = vmatpush.msra.mxu0 0.0
    %1036 = vmatpush.msra.mxu0 0.0
    %1037 = vmatpush.msra.mxu0 0.0
    %1038 = vmatpush.msra.mxu0 %v786
    %1039 = vmatpush.msra.mxu0 %v775
    %1040 = vmatpush.msra.mxu0 %v773
    %1041 = vmatpush.msra.mxu0 %v771
    %1042 = vmatmul.f32.gmra.mxu0 %v1024
    %v1043 = vpop.f32.mrf.mxu0
    %v1044 = vadd.f32 0.0, %v1043
    %1045 = vdwg.mxu0
    %1046 = vmatpush.msra.mxu0 0.0
    %1047 = vmatpush.msra.mxu0 0.0
    %1048 = vmatpush.msra.mxu0 0.0
    %1049 = vmatpush.msra.mxu0 0.0
    %1050 = vmatpush.msra.mxu0 0.0
    %1051 = vmatpush.msra.mxu0 0.0
    %1052 = vmatpush.msra.mxu0 0.0
    %1053 = vmatpush.msra.mxu0 0.0
    %1054 = vmatpush.msra.mxu0 0.0
    %1055 = vmatpush.msra.mxu0 0.0
    %1056 = vmatpush.msra.mxu0 0.0
    %1057 = vmatpush.msra.mxu0 0.0
    %1058 = vmatpush.msra.mxu0 %v789
    %1059 = vmatpush.msra.mxu0 %v776
    %1060 = vmatpush.msra.mxu0 %v774
    %1061 = vmatpush.msra.mxu0 %v772
    %1062 = vmatmul.f32.gmra.mxu0 %v1024
    %v1063 = vpop.f32.mrf.mxu0
    %v1064 = vadd.f32 0.0, %v1063
    %1065 = vdwg.mxu0
    %s1066 = scalar_lea.vmem [#allocation6], 512
    %v1067 = vld [vmem:[%s1066] sm:$0xff]
    %v1068 = vld [vmem:[%s1066 + $0x8] sm:$0xff]
    %v1069 = vld [vmem:[%s1066 + $0x10] sm:$0xff]
    %v1070 = vld [vmem:[%s1066 + $0x18] sm:$0xff]
    %v1071 = vld [vmem:[%s1066 + $0x20] sm:$0xff]
    %v1072 = vld [vmem:[%s1066 + $0x28] sm:$0xff]
    %v1073 = vld [vmem:[%s1066 + $0x30] sm:$0xff]
    %v1074 = vld [vmem:[%s1066 + $0x38] sm:$0xff]
    %v1075 = vld [vmem:[%s1066 + $0x40] sm:$0xff]
    %v1076 = vld [vmem:[%s1066 + $0x48] sm:$0xff]
    %v1077 = vld [vmem:[%s1066 + $0x50] sm:$0xff]
    %v1078 = vld [vmem:[%s1066 + $0x58] sm:$0xff]
    %v1079 = vld [vmem:[%s1066 + $0x60] sm:$0xff]
    %v1080 = vld [vmem:[%s1066 + $0x68] sm:$0xff]
    %v1081 = vld [vmem:[%s1066 + $0x70] sm:$0xff]
    %v1082 = vld [vmem:[%s1066 + $0x78] sm:$0xff]
    %v1083 = vld [vmem:[%s1066 + $0x80] sm:$0xff]
    %v1084 = vld [vmem:[%s1066 + $0x88] sm:$0xff]
    %v1085 = vld [vmem:[%s1066 + $0x90] sm:$0xff]
    %v1086 = vld [vmem:[%s1066 + $0x98] sm:$0xff]
    %v1087 = vld [vmem:[%s1066 + $0xa0] sm:$0xff]
    %v1088 = vld [vmem:[%s1066 + $0xa8] sm:$0xff]
    %v1089 = vld [vmem:[%s1066 + $0xb0] sm:$0xff]
    %v1090 = vld [vmem:[%s1066 + $0xb8] sm:$0xff]
    %v1091 = vld [vmem:[%s1066 + $0xc0] sm:$0xff]
    %v1092 = vld [vmem:[%s1066 + $0xc8] sm:$0xff]
    %v1093 = vld [vmem:[%s1066 + $0xd0] sm:$0xff]
    %v1094 = vld [vmem:[%s1066 + $0xd8] sm:$0xff]
    %v1095 = vld [vmem:[%s1066 + $0xe0] sm:$0xff]
    %v1096 = vld [vmem:[%s1066 + $0xe8] sm:$0xff]
    %v1097 = vld [vmem:[%s1066 + $0xf0] sm:$0xff]
    %v1098 = vld [vmem:[%s1066 + $0xf8] sm:$0xff]
    %1099 = vmatpush.msra.mxu0 %v1082
    %1100 = vmatpush.msra.mxu0 %v1081
    %1101 = vmatpush.msra.mxu0 %v1080
    %1102 = vmatpush.msra.mxu0 %v1079
    %1103 = vmatpush.msra.mxu0 %v1078
    %1104 = vmatpush.msra.mxu0 %v1077
    %1105 = vmatpush.msra.mxu0 %v1076
    %1106 = vmatpush.msra.mxu0 %v1075
    %1107 = vmatpush.msra.mxu0 %v1074
    %1108 = vmatpush.msra.mxu0 %v1073
    %1109 = vmatpush.msra.mxu0 %v1072
    %1110 = vmatpush.msra.mxu0 %v1071
    %1111 = vmatpush.msra.mxu0 %v1070
    %1112 = vmatpush.msra.mxu0 %v1069
    %1113 = vmatpush.msra.mxu0 %v1068
    %1114 = vmatpush.msra.mxu0 %v1067
    %1115 = vmatmul.f32.gmra.mxu0 %v1044
    %v1116 = vpop.f32.mrf.mxu0
    %v1117 = vadd.f32 0.0, %v1116
    %1118 = vdwg.mxu0
    %1119 = vmatpush.msra.mxu0 %v1098
    %1120 = vmatpush.msra.mxu0 %v1097
    %1121 = vmatpush.msra.mxu0 %v1096
    %1122 = vmatpush.msra.mxu0 %v1095
    %1123 = vmatpush.msra.mxu0 %v1094
    %1124 = vmatpush.msra.mxu0 %v1093
    %1125 = vmatpush.msra.mxu0 %v1092
    %1126 = vmatpush.msra.mxu0 %v1091
    %1127 = vmatpush.msra.mxu0 %v1090
    %1128 = vmatpush.msra.mxu0 %v1089
    %1129 = vmatpush.msra.mxu0 %v1088
    %1130 = vmatpush.msra.mxu0 %v1087
    %1131 = vmatpush.msra.mxu0 %v1086
    %1132 = vmatpush.msra.mxu0 %v1085
    %1133 = vmatpush.msra.mxu0 %v1084
    %1134 = vmatpush.msra.mxu0 %v1083
    %1135 = vmatmul.f32.gmra.mxu0 %v1064
    %v1136 = vpop.f32.mrf.mxu0
    %v1137 = vadd.f32 %v1117, %v1136
    %1138 = vdwg.mxu0
    %v1139 = vadd.f32 %v1019, %v1137
    %1140 = vst [vmem:[#allocation8] sm:$0x3] %v1139
    // Predicated region
    $region38: #{forward.1} parent=1 // pred_check
      _
    $region39: #{forward.1} parent=1 // pred_check_branch
      %1142 = sbr.rel (0) target = $region41
    $region40: #{forward.1} parent=1 // pred_region
      %1144 = vsyncadd [#allocation5], 0
      %s1146 = sshll.u32 [#allocation8], 4
      %s1147 = int_to_ptr.vmem [resolvable:$true] %s1146
      %s1148 = sshll.u32 %s7, 4
      %s1149 = int_to_ptr.hbm [resolvable:$true] %s1148
      %1151 = dma.vmem_to_hbm [thread:$0]  %s1147, 32, %s1149, [#allocation5]
    $region41: #{forward.1} parent=1 // pred_fallthru
      _
    // Predicated region
    $region42: #{forward.1} parent=1 // pred_check
      _
    $region43: #{forward.1} parent=1 // pred_check_branch
      %1153 = sbr.rel (0) target = $region45
    $region44: #{forward.1} parent=1 // pred_region
      %1155 = dma.done [#allocation5], 32
    $region45: #{forward.1} parent=1 // pred_fallthru
      _
    %1156 = vsyncpa [#allocation4], 1
    %1157 = vsyncpa [#allocation7], 1
    %1158 = vsyncpa [#allocation5], 1

</llo_original>
